<compile_context>
chip_gen: v5e
topology: v5e:2x2
jax: 0.10.0
libtpu: 0.0.40
codegen_flags: <defaults>
</compile_context>

<pallas_src>
import jax
import jax.numpy as jnp
from jax.experimental import pallas as pl
from jax.experimental.pallas import tpu as pltpu


def mlp_readout_kernel(x_ref, w1_ref, b1_ref, w2_ref, b2_ref, o_ref):
    # x_ref:  [D_in,  TILE_N]   one row tile, rows on the lane axis
    # w1_ref: [D_hid, D_in]     PyTorch weight layout; VMEM-resident across grid
    # b1_ref: [D_hid, 1]
    # w2_ref: [D_out, D_hid]
    # b2_ref: [D_out, 1]
    # o_ref:  [D_out, TILE_N]   lane-dense store
    # Layer 1 on the MXU (f32 accumulation); bias + ReLU on the VPU in the
    # feature-major layout (D_hid on sublanes -> no lane-padding waste).
    h = jnp.dot(w1_ref[...], x_ref[...], preferred_element_type=jnp.float32)
    h = jnp.maximum(h + b1_ref[...], 0.0)          # ReLU between layers only
    # Layer 2: plain MXU matmul, result already [D_out, TILE_N] (lane-dense).
    y = jnp.dot(w2_ref[...], h, preferred_element_type=jnp.float32) + b2_ref[...]
    o_ref[...] = y.astype(o_ref.dtype)


def _choose_tile_n(n, max_tile=2048):
    """Largest lane-aligned row tile that still leaves >=2 grid steps (v7x 2-TC)."""
    if n <= 256:
        return n                        # single full-extent block (allowed)
    half = -(-n // 2)                   # ceil(n / 2)
    tile = max(128, (half // 128) * 128)
    return min(tile, max_tile)


def _padded_bytes(shape, itemsize=4):
    """VMEM footprint of one buffer after (8, 128) layout padding."""
    r, c = shape[-2], shape[-1]
    lead = 1
    for d in shape[:-2]:
        lead *= d
    return lead * (-(-r // 8) * 8) * (-(-c // 128) * 128) * itemsize


def mlp_readout(x_t, w1, b1, w2, b2, *, tile_n=None):
    """MLPReadout forward, feature-major layout.

    x_t: [D_in, N]            (transposed input; producers should emit this layout)
    w1 : [D_hid, D_in], b1: [D_hid]       (PyTorch nn.Linear layout)
    w2 : [D_out, D_hid], b2: [D_out]
    Returns [N, D_out].
    """
    d_in, n = x_t.shape
    d_hid = w1.shape[0]
    d_out = w2.shape[0]
    if tile_n is None:
        tile_n = _choose_tile_n(n)
    num_tiles = pl.cdiv(n, tile_n)

    b1_c = jnp.reshape(b1, (d_hid, 1))
    b2_c = jnp.reshape(b2, (d_out, 1))

    # VMEM budget from actual usage (everything double-buffered) plus headroom.
    vmem_bytes = 2 * (
        _padded_bytes((d_in, tile_n))
        + _padded_bytes((d_out, tile_n))
        + _padded_bytes((d_hid, d_in))
        + _padded_bytes((d_hid, 1))
        + _padded_bytes((d_out, d_hid))
        + _padded_bytes((d_out, 1))
    ) + (8 << 20)

    out_t = pl.pallas_call(
        mlp_readout_kernel,
        out_shape=jax.ShapeDtypeStruct((d_out, n), jnp.float32),
        grid_spec=pltpu.PrefetchScalarGridSpec(
            num_scalar_prefetch=0,
            grid=(num_tiles,),
            in_specs=[
                # x: tiled along rows (lane axis); ragged tail handled by a
                # partial trailing block -- no wrapper-side pad.
                pl.BlockSpec((d_in, tile_n), lambda i: (0, i)),
                # Weights/biases: same block every step -> VMEM-resident, DMA'd once.
                pl.BlockSpec((d_hid, d_in), lambda i: (0, 0)),
                pl.BlockSpec((d_hid, 1), lambda i: (0, 0)),
                pl.BlockSpec((d_out, d_hid), lambda i: (0, 0)),
                pl.BlockSpec((d_out, 1), lambda i: (0, 0)),
            ],
            # Transposed output: [D_out, N] with the row tile on the lane axis.
            out_specs=pl.BlockSpec((d_out, tile_n), lambda i: (0, i)),
        ),
        compiler_params=pltpu.CompilerParams(
            dimension_semantics=("parallel",),   # v7x: shard row tiles over 2 TCs
            vmem_limit_bytes=int(vmem_bytes),
        ),
    )(x_t, w1, b1_c, w2, b2_c)

    # Back to the module's [N, D_out] layout (cheap: D_out is tiny).
    return jnp.transpose(out_t)


def reference(x, w1, b1, w2, b2):
    # x: [N, D_in]; weights in PyTorch [out, in] layout.
    h = jnp.maximum(x @ w1.T + b1, 0.0)
    return h @ w2.T + b2


if __name__ == "__main__":
    # MLPReadout(input_dim=32, output_dim=1, L=2) -> layer sizes [32, 16, 1].
    # Rows are batched (many graph representations); tile_n=512 -> 2 grid steps.
    N, D_IN, D_OUT = 1024, 32, 1
    D_HID = D_IN // 2

    key = jax.random.PRNGKey(0)
    kx, kw1, kb1, kw2, kb2 = jax.random.split(key, 5)

    # Producer emits x in feature-major [D_in, N] layout (rows on the lane axis).
    x_t = jax.random.normal(kx, (D_IN, N), dtype=jnp.float32)
    # Deterministic synthetic parameters (uniform like nn.Linear default scale),
    # in the native PyTorch [out, in] layout.
    lim1 = 1.0 / (D_IN ** 0.5)
    lim2 = 1.0 / (D_HID ** 0.5)
    w1 = jax.random.uniform(kw1, (D_HID, D_IN), minval=-lim1, maxval=lim1, dtype=jnp.float32)
    b1 = jax.random.uniform(kb1, (D_HID,), minval=-lim1, maxval=lim1, dtype=jnp.float32)
    w2 = jax.random.uniform(kw2, (D_OUT, D_HID), minval=-lim2, maxval=lim2, dtype=jnp.float32)
    b2 = jax.random.uniform(kb2, (D_OUT,), minval=-lim2, maxval=lim2, dtype=jnp.float32)

    out = mlp_readout(x_t, w1, b1, w2, b2)
    out = jax.block_until_ready(out)

    ref = reference(jnp.transpose(x_t), w1, b1, w2, b2)
    assert out.shape == (N, D_OUT)
    assert jnp.allclose(out, ref, atol=1e-4, rtol=1e-4), "mismatch vs reference"

    print("KERNEL_OK")
</pallas_src>

<mosaic_0001>
module attributes {stable_mosaic.version = 11 : i64} {
  func.func @mlp_readout_kernel(%arg0: i32, %arg1: memref<32x512xf32, #tpu.memory_space<vmem>>, %arg2: memref<16x32xf32, #tpu.memory_space<vmem>>, %arg3: memref<16x1xf32, #tpu.memory_space<vmem>>, %arg4: memref<1x16xf32, #tpu.memory_space<vmem>>, %arg5: memref<1x1xf32, #tpu.memory_space<vmem>>, %arg6: memref<1x512xf32, #tpu.memory_space<vmem>>) attributes {dimension_semantics = [#tpu.dimension_semantics<parallel>], iteration_bounds = array<i64: 2>, scalar_prefetch = 0 : i64, scratch_operands = 0 : i64, tpu.core_type = #tpu.core_type<tc>, window_params = [{transform_indices = @transform_0, window_bounds = array<i64: 32, 512>}, {pipeline_mode = #tpu.pipeline_mode<synchronous>, transform_indices = @transform_1, window_bounds = array<i64: 16, 32>}, {pipeline_mode = #tpu.pipeline_mode<synchronous>, transform_indices = @transform_2, window_bounds = array<i64: 16, 1>}, {pipeline_mode = #tpu.pipeline_mode<synchronous>, transform_indices = @transform_3, window_bounds = array<i64: 1, 16>}, {pipeline_mode = #tpu.pipeline_mode<synchronous>, transform_indices = @transform_4, window_bounds = array<i64: 1, 1>}, {transform_indices = @transform_5, window_bounds = array<i64: 1, 512>}]} {
    %c0 = arith.constant 0 : index
    %c0_0 = arith.constant 0 : index
    %0 = vector.load %arg2[%c0, %c0_0] : memref<16x32xf32, #tpu.memory_space<vmem>>, vector<16x32xf32>
    %c0_1 = arith.constant 0 : index
    %c0_2 = arith.constant 0 : index
    %1 = vector.load %arg1[%c0_1, %c0_2] : memref<32x512xf32, #tpu.memory_space<vmem>>, vector<32x512xf32>
    %cst = arith.constant dense<0.000000e+00> : vector<16x512xf32>
    %2 = tpu.matmul %0, %1, %cst {dimension_numbers = #tpu.dot_dimension_numbers<[1], [0], [0], [1], [0, 0, 1, 1], [], []>} : vector<16x32xf32>, vector<32x512xf32>, vector<16x512xf32> -> vector<16x512xf32>
    %c0_3 = arith.constant 0 : index
    %c0_4 = arith.constant 0 : index
    %3 = vector.load %arg3[%c0_3, %c0_4] : memref<16x1xf32, #tpu.memory_space<vmem>>, vector<16x1xf32>
    %4 = vector.broadcast %3 : vector<16x1xf32> to vector<16x512xf32>
    %5 = arith.addf %2, %4 : vector<16x512xf32>
    %cst_5 = arith.constant 0.000000e+00 : f32
    %6 = vector.broadcast %cst_5 : f32 to vector<16x512xf32>
    %7 = arith.maximumf %5, %6 : vector<16x512xf32>
    %c0_6 = arith.constant 0 : index
    %c0_7 = arith.constant 0 : index
    %8 = vector.load %arg4[%c0_6, %c0_7] : memref<1x16xf32, #tpu.memory_space<vmem>>, vector<1x16xf32>
    %cst_8 = arith.constant dense<0.000000e+00> : vector<1x512xf32>
    %9 = tpu.matmul %8, %7, %cst_8 {dimension_numbers = #tpu.dot_dimension_numbers<[1], [0], [0], [1], [0, 0, 1, 1], [], []>} : vector<1x16xf32>, vector<16x512xf32>, vector<1x512xf32> -> vector<1x512xf32>
    %c0_9 = arith.constant 0 : index
    %c0_10 = arith.constant 0 : index
    %10 = vector.load %arg5[%c0_9, %c0_10] : memref<1x1xf32, #tpu.memory_space<vmem>>, vector<1x1xf32>
    %11 = vector.broadcast %10 : vector<1x1xf32> to vector<1x512xf32>
    %12 = arith.addf %9, %11 : vector<1x512xf32>
    %c0_11 = arith.constant 0 : index
    %c0_12 = arith.constant 0 : index
    %13 = vector.load %arg6[%c0_11, %c0_12] : memref<1x512xf32, #tpu.memory_space<vmem>>, vector<1x512xf32>
    tpu.vector_store %arg6[%c0_11, %c0_12], %12 {strides = array<i32>} : memref<1x512xf32, #tpu.memory_space<vmem>>, vector<1x512xf32>,
    return
  }
  func.func @transform_0(%arg0: i32) -> (i32, i32) {
    %c0_i32 = arith.constant 0 : i32
    %c0_i32_0 = arith.constant 0 : i32
    return %c0_i32, %arg0 : i32, i32
  }
  func.func @transform_1(%arg0: i32) -> (i32, i32) {
    %c0_i32 = arith.constant 0 : i32
    %c0_i32_0 = arith.constant 0 : i32
    %c0_i32_1 = arith.constant 0 : i32
    return %c0_i32, %c0_i32_0 : i32, i32
  }
  func.func @transform_2(%arg0: i32) -> (i32, i32) {
    %c0_i32 = arith.constant 0 : i32
    %c0_i32_0 = arith.constant 0 : i32
    %c0_i32_1 = arith.constant 0 : i32
    return %c0_i32, %c0_i32_0 : i32, i32
  }
  func.func @transform_3(%arg0: i32) -> (i32, i32) {
    %c0_i32 = arith.constant 0 : i32
    %c0_i32_0 = arith.constant 0 : i32
    %c0_i32_1 = arith.constant 0 : i32
    return %c0_i32, %c0_i32_0 : i32, i32
  }
  func.func @transform_4(%arg0: i32) -> (i32, i32) {
    %c0_i32 = arith.constant 0 : i32
    %c0_i32_0 = arith.constant 0 : i32
    %c0_i32_1 = arith.constant 0 : i32
    return %c0_i32, %c0_i32_0 : i32, i32
  }
  func.func @transform_5(%arg0: i32) -> (i32, i32) {
    %c0_i32 = arith.constant 0 : i32
    %c0_i32_0 = arith.constant 0 : i32
    return %c0_i32, %arg0 : i32, i32
  }
}

</mosaic_0001>

<llo_original>
// kernel: tpu_custom_call.1
$region0: #{tpu_custom_call.1}
  #allocation0 [shape = 'u32[]', space=smem, size = 0x4, offset = 0x4, fixed_abs, tag = 'smem constant byte address 0x4 - core index']
  #allocation1 [shape = 'u32[72,128]{1,0:T(1,128)}', space=vmem, size = 0x9000, scoped, tag = 'internal scratch']
  #allocation2 [shape = 'f32[1,1]{1,0:T(1,128)S(1)}', space=vmem, size = 0x200, scoped, tag = 'scoped memory for tpu_custom_call.1']
  %s0 = inlined_call_operand.hbm [shape: f32[32,1024], index: 0, kind: input, shape index: {}]
  %s1 = inlined_call_operand.vmem [shape: f32[16,32], index: 1, kind: input, shape index: {}]
  %s2 = inlined_call_operand.vmem [shape: f32[16,1], index: 2, kind: input, shape index: {}]
  %s3 = inlined_call_operand.vmem [shape: f32[1,16], index: 3, kind: input, shape index: {}]
  %s4 = inlined_call_operand.<no memory space> [shape: f32[1,1], index: 4, kind: input, shape index: {}]
  %s5 = inlined_call_operand.hbm [shape: f32[1,1024], index: 5, kind: output, shape index: {}]
  %s6 = sld [smem:[#allocation0]]
  $region57: #{tpu_custom_call.1} parent=0
    _
  %s8 = ssub.s32 1, %s6
  %s9 = scalar_select 0, %s8, %s6
  %v10 = vstv %s4
  %11 = vst [vmem:[#allocation2] sm:$0x1] %v10
  $region1: #{tpu_custom_call.1} parent=0
    #allocation3 [shape = 'u8[131072]{0}', space=vmem, size = 0x20000, scoped, tag = 'input window, operand 0']
    #allocation4 [shape = 's32[2]{0}', space=sflag, size = 0x8, scoped, tag = 'scoped memory for tpu_custom_call.1']
    #allocation5 [shape = 's32[2]{0}', space=sflag, size = 0x8, scoped, tag = 'scoped memory for tpu_custom_call.1']
    #allocation6 [shape = 'u8[4096]{0}', space=vmem, size = 0x1000, scoped, tag = 'output window, operand 0']
    %12 = vsyncpa [#allocation4], 0
    %s13 = scalar_lea.sflag [#allocation4], 1
    %14 = vsyncpa %s13, 0
    %15 = vsyncpa [#allocation5], 0
    %s16 = scalar_lea.sflag [#allocation5], 1
    %17 = vsyncpa %s16, 0
    loop: start=0, step=1, limit=4
    $region2: #{tpu_custom_call.1} parent=1 // loop_pre_header
      _
    $region3: #{tpu_custom_call.1} parent=1 // loop_header
      %s19 = sphi 0, %s23
      %p20 = scmp.ge.s32.totalorder %s19, 4
      %s29 = sphi 0, %s31
      %s32 = sphi 0, %s29
      %s33 = sphi 0, %s32
      %s49 = sphi 0, %s33
      %s53 = sphi 0, %s53
      %s55 = sphi 0, %s53
      %s56 = sphi 0, %s55
      %s70 = sphi 0, %s56
      %s74 = sphi 0, %s74
      %s76 = sphi 0, %s74
      %s77 = sphi 0, %s76
      %s91 = sphi 0, %s77
      %s95 = sphi 0, %s95
      %s97 = sphi 0, %s95
      %s98 = sphi 0, %s97
      %s112 = sphi 0, %s98
      %s116 = sphi 0, %s116
      %s118 = sphi 0, %s116
      %s119 = sphi 0, %s118
      %s133 = sphi 0, %s119
      %s139 = sphi 0, %s141
      %s142 = sphi 0, %s139
      %s143 = sphi 0, %s142
      %s159 = sphi 0, %s143
    $region4: #{tpu_custom_call.1} parent=1 // loop_header_branch
      %22 = sbr.rel (%p20) target = $region8
    $region5: #{tpu_custom_call.1} parent=1 // loop_body
      %s24 = ssub.s32 %s19, 1
      %s25 = ssub.s32 %s19, 2
      %s26 = sadd.s32 %s19, 1
      %s27 = ssub.s32 %s19, %s26
      %p28 = scmp.eq.s32.totalorder %s27, 0
      %s30 = sadd.s32 %s29, 1
      %s31 = scalar_select %p28, %s29, %s30
      %p34 = pneg %p28
      %p35 = scmp.eq.s32.totalorder %s19, 1
      %p36 = por %p34, %p35
      %p37 = scmp.ne.s32.totalorder %s29, %s32
      %p38 = scmp.eq.s32.totalorder %s19, 0
      %p39 = por %p37, %p38
      %p40 = scmp.ne.s32.totalorder %s29, %s32
      %p41 = scmp.eq.s32.totalorder %s24, 1
      %p42 = por %p40, %p41
      %p43 = scmp.ne.s32.totalorder %s32, %s33
      %p44 = scmp.eq.s32.totalorder %s24, 0
      %p45 = por %p43, %p44
      %p46 = scmp.ne.s32.totalorder %s32, %s33
      %p47 = scmp.eq.s32.totalorder %s25, 1
      %p48 = por %p46, %p47
      %p50 = scmp.ne.s32.totalorder %s33, %s49
      %p51 = scmp.eq.s32.totalorder %s25, 0
      %p52 = por %p50, %p51
      %s54 = sadd.s32 %s53, 1
      %p57 = scmp.eq.s32.totalorder %s19, 1
      %p58 = scmp.ne.s32.totalorder %s53, %s55
      %p59 = scmp.eq.s32.totalorder %s19, 0
      %p60 = por %p58, %p59
      %p61 = scmp.ne.s32.totalorder %s53, %s55
      %p62 = scmp.eq.s32.totalorder %s24, 1
      %p63 = por %p61, %p62
      %p64 = scmp.ne.s32.totalorder %s55, %s56
      %p65 = scmp.eq.s32.totalorder %s24, 0
      %p66 = por %p64, %p65
      %p67 = scmp.ne.s32.totalorder %s55, %s56
      %p68 = scmp.eq.s32.totalorder %s25, 1
      %p69 = por %p67, %p68
      %p71 = scmp.ne.s32.totalorder %s56, %s70
      %p72 = scmp.eq.s32.totalorder %s25, 0
      %p73 = por %p71, %p72
      %s75 = sadd.s32 %s74, 1
      %p78 = scmp.eq.s32.totalorder %s19, 1
      %p79 = scmp.ne.s32.totalorder %s74, %s76
      %p80 = scmp.eq.s32.totalorder %s19, 0
      %p81 = por %p79, %p80
      %p82 = scmp.ne.s32.totalorder %s74, %s76
      %p83 = scmp.eq.s32.totalorder %s24, 1
      %p84 = por %p82, %p83
      %p85 = scmp.ne.s32.totalorder %s76, %s77
      %p86 = scmp.eq.s32.totalorder %s24, 0
      %p87 = por %p85, %p86
      %p88 = scmp.ne.s32.totalorder %s76, %s77
      %p89 = scmp.eq.s32.totalorder %s25, 1
      %p90 = por %p88, %p89
      %p92 = scmp.ne.s32.totalorder %s77, %s91
      %p93 = scmp.eq.s32.totalorder %s25, 0
      %p94 = por %p92, %p93
      %s96 = sadd.s32 %s95, 1
      %p99 = scmp.eq.s32.totalorder %s19, 1
      %p100 = scmp.ne.s32.totalorder %s95, %s97
      %p101 = scmp.eq.s32.totalorder %s19, 0
      %p102 = por %p100, %p101
      %p103 = scmp.ne.s32.totalorder %s95, %s97
      %p104 = scmp.eq.s32.totalorder %s24, 1
      %p105 = por %p103, %p104
      %p106 = scmp.ne.s32.totalorder %s97, %s98
      %p107 = scmp.eq.s32.totalorder %s24, 0
      %p108 = por %p106, %p107
      %p109 = scmp.ne.s32.totalorder %s97, %s98
      %p110 = scmp.eq.s32.totalorder %s25, 1
      %p111 = por %p109, %p110
      %p113 = scmp.ne.s32.totalorder %s98, %s112
      %p114 = scmp.eq.s32.totalorder %s25, 0
      %p115 = por %p113, %p114
      %s117 = sadd.s32 %s116, 1
      %p120 = scmp.eq.s32.totalorder %s19, 1
      %p121 = scmp.ne.s32.totalorder %s116, %s118
      %p122 = scmp.eq.s32.totalorder %s19, 0
      %p123 = por %p121, %p122
      %p124 = scmp.ne.s32.totalorder %s116, %s118
      %p125 = scmp.eq.s32.totalorder %s24, 1
      %p126 = por %p124, %p125
      %p127 = scmp.ne.s32.totalorder %s118, %s119
      %p128 = scmp.eq.s32.totalorder %s24, 0
      %p129 = por %p127, %p128
      %p130 = scmp.ne.s32.totalorder %s118, %s119
      %p131 = scmp.eq.s32.totalorder %s25, 1
      %p132 = por %p130, %p131
      %p134 = scmp.ne.s32.totalorder %s119, %s133
      %p135 = scmp.eq.s32.totalorder %s25, 0
      %p136 = por %p134, %p135
      %s137 = ssub.s32 %s19, %s26
      %p138 = scmp.eq.s32.totalorder %s137, 0
      %s140 = sadd.s32 %s139, 1
      %s141 = scalar_select %p138, %s139, %s140
      %p144 = pneg %p138
      %p145 = scmp.eq.s32.totalorder %s19, 1
      %p146 = por %p144, %p145
      %p147 = scmp.ne.s32.totalorder %s139, %s142
      %p148 = scmp.eq.s32.totalorder %s19, 0
      %p149 = por %p147, %p148
      %p150 = scmp.ne.s32.totalorder %s139, %s142
      %p151 = scmp.eq.s32.totalorder %s24, 1
      %p152 = por %p150, %p151
      %p153 = scmp.ne.s32.totalorder %s142, %s143
      %p154 = scmp.eq.s32.totalorder %s24, 0
      %p155 = por %p153, %p154
      %p156 = scmp.ne.s32.totalorder %s142, %s143
      %p157 = scmp.eq.s32.totalorder %s25, 1
      %p158 = por %p156, %p157
      %p160 = scmp.ne.s32.totalorder %s143, %s159
      %p161 = scmp.eq.s32.totalorder %s25, 0
      %p162 = por %p160, %p161
      %p163 = scmp.le.s32.totalorder 1, %s19
      %p164 = scmp.lt.s32.totalorder %s19, 3
      %p165 = pnand %p163, %p164
      %p166 = pneg %p165
      // Predicated region
      $region9: #{tpu_custom_call.1} parent=5 // pred_check
        _
      $region10: #{tpu_custom_call.1} parent=5 // pred_check_branch
        %168 = sbr.rel (%p165) target = $region12
      $region11: #{tpu_custom_call.1} parent=5 // pred_region
        %s169 = ssub.s32 %s19, 1
        // Predicated region
        $region13: #{tpu_custom_call.1} parent=11 // pred_check
          %p170 = pneg %p66
        $region14: #{tpu_custom_call.1} parent=11 // pred_check_branch
          %172 = sbr.rel (%p170) target = $region16
        $region15: #{tpu_custom_call.1} parent=11 // pred_region
          _
        $region16: #{tpu_custom_call.1} parent=11 // pred_fallthru
          _
        // Predicated region
        $region17: #{tpu_custom_call.1} parent=11 // pred_check
          %p173 = pneg %p87
        $region18: #{tpu_custom_call.1} parent=11 // pred_check_branch
          %175 = sbr.rel (%p173) target = $region20
        $region19: #{tpu_custom_call.1} parent=11 // pred_region
          _
        $region20: #{tpu_custom_call.1} parent=11 // pred_fallthru
          _
        // Predicated region
        $region21: #{tpu_custom_call.1} parent=11 // pred_check
          %p176 = pneg %p108
        $region22: #{tpu_custom_call.1} parent=11 // pred_check_branch
          %178 = sbr.rel (%p176) target = $region24
        $region23: #{tpu_custom_call.1} parent=11 // pred_region
          _
        $region24: #{tpu_custom_call.1} parent=11 // pred_fallthru
          _
        // Predicated region
        $region25: #{tpu_custom_call.1} parent=11 // pred_check
          %p179 = pneg %p129
        $region26: #{tpu_custom_call.1} parent=11 // pred_check_branch
          %181 = sbr.rel (%p179) target = $region28
        $region27: #{tpu_custom_call.1} parent=11 // pred_region
          _
        $region28: #{tpu_custom_call.1} parent=11 // pred_fallthru
          _
      $region12: #{tpu_custom_call.1} parent=5 // pred_fallthru
        _
      %p182 = scmp.lt.s32.totalorder %s19, 2
      // Predicated region
      $region29: #{tpu_custom_call.1} parent=5 // pred_check
        %p183 = pneg %p182
      $region30: #{tpu_custom_call.1} parent=5 // pred_check_branch
        %185 = sbr.rel (%p183) target = $region32
      $region31: #{tpu_custom_call.1} parent=5 // pred_region
        // Predicated region
        $region33: #{tpu_custom_call.1} parent=31 // pred_check
          %p186 = pneg %p39
        $region34: #{tpu_custom_call.1} parent=31 // pred_check_branch
          %188 = sbr.rel (%p186) target = $region36
        $region35: #{tpu_custom_call.1} parent=31 // pred_region
          %s189 = sand.u32 %s29, 1
          %s190 = scalar_lea.sflag [#allocation4], %s189
          %s191 = sand.u32 %s29, 1
          %s192 = smul.addr %s191, 128
          %s193 = scalar_lea.vmem [#allocation3], %s192
          %s194 = smul.u32 4, %s19
          %196 = vsyncadd %s190, 0
          %s197 = smul.addr %s194, 8
          %s198 = scalar_lea.hbm %s0, %s197
          %s199 = sshll.u32 %s198, 4
          %s200 = int_to_ptr.hbm [resolvable:$true] %s199
          %s201 = sshll.u32 %s193, 4
          %s202 = int_to_ptr.vmem [resolvable:$true] %s201
          %207 = dma.hbm_to_vmem [thread:$0]  %s200, 2048, %s202, %s190, 1024, 512, 32
        $region36: #{tpu_custom_call.1} parent=31 // pred_fallthru
          _
      $region32: #{tpu_custom_call.1} parent=5 // pred_fallthru
        _
      %p208 = scmp.le.s32.totalorder 1, %s19
      %p209 = scmp.lt.s32.totalorder %s19, 3
      %p210 = pnand %p208, %p209
      %p211 = pneg %p210
      // Predicated region
      $region37: #{tpu_custom_call.1} parent=5 // pred_check
        _
      $region38: #{tpu_custom_call.1} parent=5 // pred_check_branch
        %213 = sbr.rel (%p210) target = $region40
      $region39: #{tpu_custom_call.1} parent=5 // pred_region
        %s214 = ssub.s32 %s19, 1
        %s215 = sand.u32 %s32, 1
        %s216 = scalar_lea.sflag [#allocation4], %s215
        %s217 = sand.u32 %s32, 1
        %s218 = smul.addr %s217, 128
        %s219 = scalar_lea.vmem [#allocation3], %s218
        // Predicated region
        $region41: #{tpu_custom_call.1} parent=39 // pred_check
          %p220 = pneg %p45
        $region42: #{tpu_custom_call.1} parent=39 // pred_check_branch
          %222 = sbr.rel (%p220) target = $region44
        $region43: #{tpu_custom_call.1} parent=39 // pred_region
          %224 = dma.done %s216, 2048
        $region44: #{tpu_custom_call.1} parent=39 // pred_fallthru
          _
        %s225 = sand.u32 %s32, 1
        %s226 = scalar_lea.sflag [#allocation4], %s225
        %s227 = sand.u32 %s32, 1
        %s228 = smul.addr %s227, 128
        %s229 = scalar_lea.vmem [#allocation3], %s228
        %p230 = pneg %p45
        %p231 = pneg %p42
        %p232 = pneg %p66
        %p233 = pneg %p63
        %p234 = pneg %p87
        %p235 = pneg %p84
        %p236 = pneg %p108
        %p237 = pneg %p105
        %p238 = pneg %p129
        %p239 = pneg %p126
        %p240 = pneg %p155
        %p241 = pneg %p152
        %s242 = sand.u32 %s142, 1
        %s243 = scalar_lea.sflag [#allocation5], %s242
        %s244 = sand.u32 %s142, 1
        %s245 = smul.addr %s244, 4
        %s246 = scalar_lea.vmem [#allocation6], %s245
        %s247 = smul.u32 4, %s24
        %s248 = smul.u32 4, %s24
        %v249 = vld [vmem:[%s1] sm:$0xff]
        %v250 = vld [vmem:[%s1 + $0x8] sm:$0xff]
        %v251 = vld [vmem:[%s219] sm:$0xff]
        %v252 = vld [vmem:[%s219 + $0x8] sm:$0xff]
        %v253 = vld [vmem:[%s219 + $0x10] sm:$0xff]
        %v254 = vld [vmem:[%s219 + $0x18] sm:$0xff]
        %v255 = vld [vmem:[%s219 + $0x20] sm:$0xff]
        %v256 = vld [vmem:[%s219 + $0x28] sm:$0xff]
        %v257 = vld [vmem:[%s219 + $0x30] sm:$0xff]
        %v258 = vld [vmem:[%s219 + $0x38] sm:$0xff]
        %v259 = vld [vmem:[%s219 + $0x40] sm:$0xff]
        %v260 = vld [vmem:[%s219 + $0x48] sm:$0xff]
        %v261 = vld [vmem:[%s219 + $0x50] sm:$0xff]
        %v262 = vld [vmem:[%s219 + $0x58] sm:$0xff]
        %v263 = vld [vmem:[%s219 + $0x60] sm:$0xff]
        %v264 = vld [vmem:[%s219 + $0x68] sm:$0xff]
        %v265 = vld [vmem:[%s219 + $0x70] sm:$0xff]
        %v266 = vld [vmem:[%s219 + $0x78] sm:$0xff]
        %v267 = vld [vmem:[%s2] sm:$0xff]
        %v268 = vld [vmem:[%s2 + $0x8] sm:$0xff]
        %270 = vset.pattern.permute.xlu0 0
        %271 = vperm.xlu0 %270, %v267
        %v272 = vpop.permute.xlu0 %271
        %275 = vset.pattern.permute.xlu0 0
        %276 = vperm.xlu0 %275, %v268
        %v277 = vpop.permute.xlu0 %276
        %vm279 = vcmask 261120
        %v281 = vsel %vm279, %v249, 0
        %v284 = vsel %vm279, %v250, 0
        %286 = vmatpush.msra.mxu0 0.0
        %287 = vmatpush.msra.mxu0 0.0
        %288 = vmatpush.msra.mxu0 0.0
        %289 = vmatpush.msra.mxu0 0.0
        %290 = vmatpush.msra.mxu0 0.0
        %291 = vmatpush.msra.mxu0 0.0
        %292 = vmatpush.msra.mxu0 0.0
        %293 = vmatpush.msra.mxu0 0.0
        %294 = vmatpush.msra.mxu0 0.0
        %295 = vmatpush.msra.mxu0 0.0
        %296 = vmatpush.msra.mxu0 0.0
        %297 = vmatpush.msra.mxu0 0.0
        %298 = vmatpush.msra.mxu0 %v263
        %299 = vmatpush.msra.mxu0 %v259
        %300 = vmatpush.msra.mxu0 %v255
        %301 = vmatpush.msra.mxu0 %v251
        %302 = vmatmul.f32.gmra.mxu0 %v281
        %v303 = vpop.f32.mrf.mxu0
        %v304 = vadd.f32 %v272, %v303
        %305 = vmatmul.f32.gmra.mxu0 %v284
        %v306 = vpop.f32.mrf.mxu0
        %v307 = vadd.f32 %v277, %v306
        %308 = vdwg.mxu0
        %309 = vmatpush.msra.mxu0 0.0
        %310 = vmatpush.msra.mxu0 0.0
        %311 = vmatpush.msra.mxu0 0.0
        %312 = vmatpush.msra.mxu0 0.0
        %313 = vmatpush.msra.mxu0 0.0
        %314 = vmatpush.msra.mxu0 0.0
        %315 = vmatpush.msra.mxu0 0.0
        %316 = vmatpush.msra.mxu0 0.0
        %317 = vmatpush.msra.mxu0 0.0
        %318 = vmatpush.msra.mxu0 0.0
        %319 = vmatpush.msra.mxu0 0.0
        %320 = vmatpush.msra.mxu0 0.0
        %321 = vmatpush.msra.mxu0 %v264
        %322 = vmatpush.msra.mxu0 %v260
        %323 = vmatpush.msra.mxu0 %v256
        %324 = vmatpush.msra.mxu0 %v252
        %325 = vmatmul.f32.gmra.mxu0 %v281
        %v326 = vpop.f32.mrf.mxu0
        %v327 = vadd.f32 %v272, %v326
        %328 = vmatmul.f32.gmra.mxu0 %v284
        %v329 = vpop.f32.mrf.mxu0
        %v330 = vadd.f32 %v277, %v329
        %331 = vdwg.mxu0
        %332 = vmatpush.msra.mxu0 0.0
        %333 = vmatpush.msra.mxu0 0.0
        %334 = vmatpush.msra.mxu0 0.0
        %335 = vmatpush.msra.mxu0 0.0
        %336 = vmatpush.msra.mxu0 0.0
        %337 = vmatpush.msra.mxu0 0.0
        %338 = vmatpush.msra.mxu0 0.0
        %339 = vmatpush.msra.mxu0 0.0
        %340 = vmatpush.msra.mxu0 0.0
        %341 = vmatpush.msra.mxu0 0.0
        %342 = vmatpush.msra.mxu0 0.0
        %343 = vmatpush.msra.mxu0 0.0
        %344 = vmatpush.msra.mxu0 %v265
        %345 = vmatpush.msra.mxu0 %v261
        %346 = vmatpush.msra.mxu0 %v257
        %347 = vmatpush.msra.mxu0 %v253
        %348 = vmatmul.f32.gmra.mxu0 %v281
        %v349 = vpop.f32.mrf.mxu0
        %v350 = vadd.f32 %v272, %v349
        %351 = vmatmul.f32.gmra.mxu0 %v284
        %v352 = vpop.f32.mrf.mxu0
        %v353 = vadd.f32 %v277, %v352
        %354 = vdwg.mxu0
        %355 = vmatpush.msra.mxu0 0.0
        %356 = vmatpush.msra.mxu0 0.0
        %357 = vmatpush.msra.mxu0 0.0
        %358 = vmatpush.msra.mxu0 0.0
        %359 = vmatpush.msra.mxu0 0.0
        %360 = vmatpush.msra.mxu0 0.0
        %361 = vmatpush.msra.mxu0 0.0
        %362 = vmatpush.msra.mxu0 0.0
        %363 = vmatpush.msra.mxu0 0.0
        %364 = vmatpush.msra.mxu0 0.0
        %365 = vmatpush.msra.mxu0 0.0
        %366 = vmatpush.msra.mxu0 0.0
        %367 = vmatpush.msra.mxu0 %v266
        %368 = vmatpush.msra.mxu0 %v262
        %369 = vmatpush.msra.mxu0 %v258
        %370 = vmatpush.msra.mxu0 %v254
        %371 = vmatmul.f32.gmra.mxu0 %v281
        %v372 = vpop.f32.mrf.mxu0
        %v373 = vadd.f32 %v272, %v372
        %374 = vmatmul.f32.gmra.mxu0 %v284
        %v375 = vpop.f32.mrf.mxu0
        %v376 = vadd.f32 %v277, %v375
        %377 = vdwg.mxu0
        %v378 = vmax.f32 %v304, 0.0
        %v379 = vmax.f32 %v327, 0.0
        %v380 = vmax.f32 %v350, 0.0
        %v381 = vmax.f32 %v373, 0.0
        %v382 = vmax.f32 %v307, 0.0
        %v383 = vmax.f32 %v330, 0.0
        %v384 = vmax.f32 %v353, 0.0
        %v385 = vmax.f32 %v376, 0.0
        %v386 = vld [vmem:[%s3] sm:$0x1]
        %v387 = vld [vmem:[#allocation2] sm:$0x1]
        %389 = vset.pattern.permute.xlu0 0
        %390 = vperm.xlu0 %389, %v387
        %v391 = vpop.permute.xlu0 %390
        %v393 = vperm.slane %v391, 0
        %vm394 = vcmask 130048
        %v396 = vsel %vm394, %v386, 0
        %398 = vmatpush.msra.mxu0 0.0
        %399 = vmatpush.msra.mxu0 0.0
        %400 = vmatpush.msra.mxu0 0.0
        %401 = vmatpush.msra.mxu0 0.0
        %402 = vmatpush.msra.mxu0 0.0
        %403 = vmatpush.msra.mxu0 0.0
        %404 = vmatpush.msra.mxu0 0.0
        %405 = vmatpush.msra.mxu0 0.0
        %406 = vmatpush.msra.mxu0 0.0
        %407 = vmatpush.msra.mxu0 0.0
        %408 = vmatpush.msra.mxu0 0.0
        %409 = vmatpush.msra.mxu0 0.0
        %410 = vmatpush.msra.mxu0 0.0
        %411 = vmatpush.msra.mxu0 0.0
        %412 = vmatpush.msra.mxu0 %v382
        %413 = vmatpush.msra.mxu0 %v378
        %414 = vmatmul.f32.gmra.mxu0 %v396
        %v415 = vpop.f32.mrf.mxu0
        %v416 = vadd.f32 %v393, %v415
        %417 = vdwg.mxu0
        %418 = vmatpush.msra.mxu0 0.0
        %419 = vmatpush.msra.mxu0 0.0
        %420 = vmatpush.msra.mxu0 0.0
        %421 = vmatpush.msra.mxu0 0.0
        %422 = vmatpush.msra.mxu0 0.0
        %423 = vmatpush.msra.mxu0 0.0
        %424 = vmatpush.msra.mxu0 0.0
        %425 = vmatpush.msra.mxu0 0.0
        %426 = vmatpush.msra.mxu0 0.0
        %427 = vmatpush.msra.mxu0 0.0
        %428 = vmatpush.msra.mxu0 0.0
        %429 = vmatpush.msra.mxu0 0.0
        %430 = vmatpush.msra.mxu0 0.0
        %431 = vmatpush.msra.mxu0 0.0
        %432 = vmatpush.msra.mxu0 %v383
        %433 = vmatpush.msra.mxu0 %v379
        %434 = vmatmul.f32.gmra.mxu0 %v396
        %v435 = vpop.f32.mrf.mxu0
        %v436 = vadd.f32 %v393, %v435
        %437 = vdwg.mxu0
        %438 = vmatpush.msra.mxu0 0.0
        %439 = vmatpush.msra.mxu0 0.0
        %440 = vmatpush.msra.mxu0 0.0
        %441 = vmatpush.msra.mxu0 0.0
        %442 = vmatpush.msra.mxu0 0.0
        %443 = vmatpush.msra.mxu0 0.0
        %444 = vmatpush.msra.mxu0 0.0
        %445 = vmatpush.msra.mxu0 0.0
        %446 = vmatpush.msra.mxu0 0.0
        %447 = vmatpush.msra.mxu0 0.0
        %448 = vmatpush.msra.mxu0 0.0
        %449 = vmatpush.msra.mxu0 0.0
        %450 = vmatpush.msra.mxu0 0.0
        %451 = vmatpush.msra.mxu0 0.0
        %452 = vmatpush.msra.mxu0 %v384
        %453 = vmatpush.msra.mxu0 %v380
        %454 = vmatmul.f32.gmra.mxu0 %v396
        %v455 = vpop.f32.mrf.mxu0
        %v456 = vadd.f32 %v393, %v455
        %457 = vdwg.mxu0
        %458 = vmatpush.msra.mxu0 0.0
        %459 = vmatpush.msra.mxu0 0.0
        %460 = vmatpush.msra.mxu0 0.0
        %461 = vmatpush.msra.mxu0 0.0
        %462 = vmatpush.msra.mxu0 0.0
        %463 = vmatpush.msra.mxu0 0.0
        %464 = vmatpush.msra.mxu0 0.0
        %465 = vmatpush.msra.mxu0 0.0
        %466 = vmatpush.msra.mxu0 0.0
        %467 = vmatpush.msra.mxu0 0.0
        %468 = vmatpush.msra.mxu0 0.0
        %469 = vmatpush.msra.mxu0 0.0
        %470 = vmatpush.msra.mxu0 0.0
        %471 = vmatpush.msra.mxu0 0.0
        %472 = vmatpush.msra.mxu0 %v385
        %473 = vmatpush.msra.mxu0 %v381
        %474 = vmatmul.f32.gmra.mxu0 %v396
        %v475 = vpop.f32.mrf.mxu0
        %v476 = vadd.f32 %v393, %v475
        %477 = vdwg.mxu0
        %v482 = vrot.slane %v436, 7
        %v483 = vrot.slane %v456, 6
        %v484 = vrot.slane %v476, 5
        %vm485 = vcmask 1040384
        %v486 = vsel %vm485, %v416, %v482
        %vm487 = vcmask 1042434
        %v488 = vsel %vm487, %v483, %v484
        %vm489 = vcmask 1041408
        %v490 = vsel %vm489, %v486, %v488
        %v492 = vlaneseq
        %vm493 = vcmp.ge.s32.totalorder %v492, 0
        %vm494 = vcmp.lt.s32.totalorder %v492, 512
        %vm495 = vmand %vm493, %vm494
        %496 = vst.msk [vmem:[%s246] sm:$0xf] %vm495, %v490
        %s497 = sand.u32 %s142, 1
        %s498 = scalar_lea.sflag [#allocation5], %s497
        %s499 = sand.u32 %s142, 1
        %s500 = smul.addr %s499, 4
        %s501 = scalar_lea.vmem [#allocation6], %s500
        // Predicated region
        $region45: #{tpu_custom_call.1} parent=39 // pred_check
          %p502 = pneg %p152
        $region46: #{tpu_custom_call.1} parent=39 // pred_check_branch
          %504 = sbr.rel (%p502) target = $region48
        $region47: #{tpu_custom_call.1} parent=39 // pred_region
          %s505 = smul.u32 4, %s24
          %507 = vsyncadd %s498, 0
          %s508 = scalar_lea.hbm %s5, %s505
          %s510 = sshll.u32 %s501, 4
          %s511 = int_to_ptr.vmem [resolvable:$true] %s510
          %s512 = sshll.u32 %s508, 4
          %s513 = int_to_ptr.hbm [resolvable:$true] %s512
          %515 = dma.vmem_to_hbm [thread:$0]  %s511, 64, %s513, %s498
        $region48: #{tpu_custom_call.1} parent=39 // pred_fallthru
          _
      $region40: #{tpu_custom_call.1} parent=5 // pred_fallthru
        _
      %p516 = scmp.le.s32.totalorder 2, %s19
      // Predicated region
      $region49: #{tpu_custom_call.1} parent=5 // pred_check
        %p517 = pneg %p516
      $region50: #{tpu_custom_call.1} parent=5 // pred_check_branch
        %519 = sbr.rel (%p517) target = $region52
      $region51: #{tpu_custom_call.1} parent=5 // pred_region
        %s520 = ssub.s32 %s19, 2
        // Predicated region
        $region53: #{tpu_custom_call.1} parent=51 // pred_check
          %p521 = pneg %p158
        $region54: #{tpu_custom_call.1} parent=51 // pred_check_branch
          %523 = sbr.rel (%p521) target = $region56
        $region55: #{tpu_custom_call.1} parent=51 // pred_region
          %s524 = sand.u32 %s143, 1
          %s525 = scalar_lea.sflag [#allocation5], %s524
          %s526 = sand.u32 %s143, 1
          %s527 = smul.addr %s526, 4
          %s528 = scalar_lea.vmem [#allocation6], %s527
          %530 = dma.done %s525, 64
        $region56: #{tpu_custom_call.1} parent=51 // pred_fallthru
          _
      $region52: #{tpu_custom_call.1} parent=5 // pred_fallthru
        _
    $region6: #{tpu_custom_call.1} parent=1 // loop_footer
      %s23 = sadd.s32 1, %s19
    $region7: #{tpu_custom_call.1} parent=1 // loop_footer_branch
      %18 = sbr.rel target = $region3
    $region8: #{tpu_custom_call.1} parent=1 // loop_exit
      _
    %531 = vsyncpa [#allocation4], 1
    %s532 = scalar_lea.sflag [#allocation4], 1
    %533 = vsyncpa %s532, 1
    %534 = vsyncpa [#allocation5], 1
    %s535 = scalar_lea.sflag [#allocation5], 1
    %536 = vsyncpa %s535, 1

</llo_original>
